<compile_context>
chip_gen: v7x
topology: tpu7x:2x2x1
jax: 0.10.0
libtpu: 0.0.40
codegen_flags: <defaults>
</compile_context>

<pallas_src>
import functools

import jax
import jax.numpy as jnp
from jax import lax
from jax.experimental import pallas as pl
from jax.experimental.pallas import tpu as pltpu


# ---------------------------------------------------------------------------
# Hardware probes (trace time; safe fallbacks if the info API differs).
# ---------------------------------------------------------------------------
def _vmem_capacity_bytes():
    try:
        return int(pltpu.get_tpu_info().vmem_capacity_bytes)
    except Exception:
        return 64 * 1024 * 1024            # conservative: v7x per-core VMEM


def _num_tensorcores():
    try:
        info = pltpu.get_tpu_info()
    except Exception:
        return 1
    for name in ("num_tensorcores", "tensorcores_per_chip", "num_cores",
                 "cores_per_chip", "core_count", "num_tensor_cores"):
        v = getattr(info, name, None)
        if v is None:
            continue
        try:
            v = int(v)
        except (TypeError, ValueError):
            continue
        if 1 <= v <= 16:
            return v
    return 1                                # unknown -> assume single TC


# ---------------------------------------------------------------------------
# Tiling selection.
# ---------------------------------------------------------------------------
def _pick_tiling(n, b, itemsize):
    """Return (tile_n, sub, b_chunk, vmem_limit_bytes) for a (B, N) problem."""
    vmem_cap = _vmem_capacity_bytes()

    # Physical sublane padding of a (b, tile) VMEM block:
    # f32 -> 8 rows, bf16 -> 16, int8/fp8 -> 32.
    row_mult = 8 * max(1, 4 // itemsize)
    b_pad = ((b + row_mult - 1) // row_mult) * row_mult

    # Inner sub-slice width / B-chunking: keep one sub-slice's live working
    # set at a handful of vregs so nothing spills.
    if b_pad <= 16:
        sub, b_chunk = 512, None            # single pass over all rows
    elif b_pad <= 32:
        sub, b_chunk = 256, None
    else:
        sub, b_chunk = 256, 32              # two chunked passes over B

    # Lane tile:
    #  (a) each input block should carry ~2 MiB of useful HBM traffic so the
    #      ~0.35 us fixed per-grid-step overhead is amortized;
    #  (b) the *physical* (sublane-padded) footprint of 2 inputs x 2 pipeline
    #      buffers must stay within half of per-core VMEM.
    byte_target = 2 << 20
    tile_from_bytes = byte_target // max(b * itemsize, 1)
    phys_per_lane = 4 * b_pad * itemsize            # 2 inputs x 2 buffers
    tile_from_vmem = (vmem_cap // 2) // max(phys_per_lane, 1)

    tile = min(tile_from_bytes, tile_from_vmem)
    tile = max(sub, (tile // sub) * sub)
    n_pad = ((n + sub - 1) // sub) * sub
    tile = min(tile, n_pad)                          # no wider than padded N

    # Declared VMEM limit: real padded footprint + accumulator + headroom.
    needed = 4 * b_pad * tile * itemsize + 8 * sub * 4 + (4 << 20)
    vmem_limit = max(needed + (8 << 20), 32 << 20)
    vmem_limit = min(vmem_limit, vmem_cap * 7 // 8)
    vmem_limit = max(vmem_limit, needed)
    return tile, sub, b_chunk, int(vmem_limit)


# ---------------------------------------------------------------------------
# Per-column correlation over the B axis for one (B, sub) lane slice.
# ---------------------------------------------------------------------------
def _col_corr_small(x_ref, y_ref, off, sub, b):
    """Single-pass centered form: all B rows at once (small padded B)."""
    del b
    x = x_ref[:, pl.ds(off, sub)].astype(jnp.float32)          # (B, sub)
    y = y_ref[:, pl.ds(off, sub)].astype(jnp.float32)
    vx = x - jnp.mean(x, axis=0, keepdims=True)
    vy = y - jnp.mean(y, axis=0, keepdims=True)
    num = jnp.sum(vx * vy, axis=0, keepdims=True)               # (1, sub)
    den = jnp.sqrt(jnp.sum(vx * vx, axis=0, keepdims=True) *
                   jnp.sum(vy * vy, axis=0, keepdims=True)) + jnp.float32(1e-6)
    return num / den


def _col_corr_chunked(x_ref, y_ref, off, sub, b, bc):
    """Two-pass centered form, chunking the B axis to bound vreg pressure."""
    nb = b // bc
    rem = b - nb * bc
    inv_b = jnp.float32(1.0 / b)
    zero = jnp.zeros((1, sub), jnp.float32)

    def load(r0, rows):
        xc = x_ref[pl.ds(r0, rows), pl.ds(off, sub)].astype(jnp.float32)
        yc = y_ref[pl.ds(r0, rows), pl.ds(off, sub)].astype(jnp.float32)
        return xc, yc

    # Pass 1: column sums -> means.
    def sum_body(c, carry):
        sx, sy = carry
        xc, yc = load(pl.multiple_of(c * bc, bc), bc)
        return (sx + jnp.sum(xc, axis=0, keepdims=True),
                sy + jnp.sum(yc, axis=0, keepdims=True))

    sx, sy = lax.fori_loop(0, nb, sum_body, (zero, zero), unroll=2)
    if rem:
        xc, yc = load(nb * bc, rem)
        sx = sx + jnp.sum(xc, axis=0, keepdims=True)
        sy = sy + jnp.sum(yc, axis=0, keepdims=True)
    mx = sx * inv_b
    my = sy * inv_b

    # Pass 2: centered second moments (data already resident in VMEM).
    def mom_body(c, carry):
        sxy, sxx, syy = carry
        xc, yc = load(pl.multiple_of(c * bc, bc), bc)
        vx = xc - mx
        vy = yc - my
        return (sxy + jnp.sum(vx * vy, axis=0, keepdims=True),
                sxx + jnp.sum(vx * vx, axis=0, keepdims=True),
                syy + jnp.sum(vy * vy, axis=0, keepdims=True))

    sxy, sxx, syy = lax.fori_loop(0, nb, mom_body, (zero, zero, zero),
                                  unroll=2)
    if rem:
        xc, yc = load(nb * bc, rem)
        vx = xc - mx
        vy = yc - my
        sxy = sxy + jnp.sum(vx * vy, axis=0, keepdims=True)
        sxx = sxx + jnp.sum(vx * vx, axis=0, keepdims=True)
        syy = syy + jnp.sum(vy * vy, axis=0, keepdims=True)

    return sxy / (jnp.sqrt(sxx * syy) + jnp.float32(1e-6))


# ---------------------------------------------------------------------------
# Kernel.
# ---------------------------------------------------------------------------
def _corr_kernel(x_ref, y_ref, o_ref, acc_ref, *,
                 n_total, tile_n, sub, b, b_chunk,
                 mask_any, unmask_any, multi_core, tiles_per_core):
    if multi_core:
        t = pl.program_id(1)                     # tile walk   ("arbitrary")
        step = pl.program_id(0) * tiles_per_core + t
    else:
        t = pl.program_id(0)
        step = t

    @pl.when(t == 0)
    def _init():
        acc_ref[...] = jnp.zeros_like(acc_ref)

    n_sub = tile_n // sub
    base_col = step * tile_n                     # global column of lane 0

    def col_corr(off):
        if b_chunk is None:
            return _col_corr_small(x_ref, y_ref, off, sub, b)
        return _col_corr_chunked(x_ref, y_ref, off, sub, b, b_chunk)

    def tile_sum(masked):
        def body(c, carry):
            off = pl.multiple_of(c * sub, sub)
            cor = col_corr(off)
            if masked:
                col = (base_col + off +
                       lax.broadcasted_iota(jnp.int32, (1, sub), 1))
                cor = jnp.where(col < n_total, cor, jnp.float32(0.0))
            return carry + cor

        unroll = min(4 if b_chunk is None else 2, n_sub)
        return lax.fori_loop(0, n_sub, body,
                             jnp.zeros((1, sub), jnp.float32),
                             unroll=unroll)

    if mask_any and unmask_any:
        # Only the final (partial) tile and redundant clamped tiles pay the
        # lane mask; interior tiles take the mask-free path.
        needs_mask = base_col + tile_n > n_total

        @pl.when(jnp.logical_not(needs_mask))
        def _interior():
            acc_ref[...] += tile_sum(False)

        @pl.when(needs_mask)
        def _edge():
            acc_ref[...] += tile_sum(True)
    elif mask_any:
        acc_ref[...] += tile_sum(True)
    else:
        acc_ref[...] += tile_sum(False)

    last_t = (pl.num_programs(1) if multi_core else pl.num_programs(0)) - 1

    @pl.when(t == last_t)
    def _finalize():
        o_ref[0, 0] = jnp.sum(acc_ref[...])      # single cross-lane reduce


# ---------------------------------------------------------------------------
# Wrapper.
# ---------------------------------------------------------------------------
def correlation_loss(x, y):
    """x, y: (B, ...) arrays.  Returns scalar 1 - mean(per-feature corr over B)."""
    assert x.shape == y.shape, "x and y must have the same shape"
    b = x.shape[0]
    n = 1
    for d in x.shape[1:]:
        n *= d
    x2 = x.reshape(b, n)
    y2 = y.reshape(b, n)

    itemsize = jnp.dtype(x2.dtype).itemsize
    tile_n, sub, b_chunk, vmem_limit = _pick_tiling(n, b, itemsize)

    n_blocks = int(pl.cdiv(n, tile_n))
    tc = _num_tensorcores()
    n_cores = min(tc, n_blocks) if (tc >= 2 and n_blocks >= 2) else 1
    multi_core = n_cores > 1
    tiles_per_core = int(pl.cdiv(n_blocks, n_cores))
    clamp = n_cores * tiles_per_core > n_blocks
    mask_any = (n_cores * tiles_per_core * tile_n) != n
    unmask_any = n >= tile_n
    if clamp or (n % tile_n != 0):
        # Every padded / redundant column must be rendered harmless by the mask.
        assert mask_any

    kernel = functools.partial(
        _corr_kernel, n_total=n, tile_n=tile_n, sub=sub, b=b, b_chunk=b_chunk,
        mask_any=mask_any, unmask_any=unmask_any, multi_core=multi_core,
        tiles_per_core=tiles_per_core)

    cost = pl.CostEstimate(
        flops=10 * b * n,
        transcendentals=n,
        bytes_accessed=2 * b * n * itemsize + 4 * n_cores)

    if multi_core:
        last_block = n_blocks - 1

        def in_map(p, t):
            idx = p * tiles_per_core + t
            if clamp:
                idx = jnp.minimum(idx, last_block)   # redundant tail -> masked to 0
            return (0, idx)

        grid = (n_cores, tiles_per_core)
        out_shape = jax.ShapeDtypeStruct((n_cores, 1), jnp.float32)
        out_spec = pl.BlockSpec((1, 1), lambda p, t: (p, 0),
                                memory_space=pltpu.SMEM)
        dim_sem = (pltpu.CORE_PARALLEL, pltpu.ARBITRARY)
    else:
        def in_map(t):
            return (0, t)

        grid = (n_blocks,)
        out_shape = jax.ShapeDtypeStruct((1, 1), jnp.float32)
        out_spec = pl.BlockSpec((1, 1), lambda t: (0, 0),
                                memory_space=pltpu.SMEM)
        dim_sem = ("arbitrary",)

    partials = pl.pallas_call(
        kernel,
        out_shape=out_shape,
        grid_spec=pltpu.PrefetchScalarGridSpec(
            num_scalar_prefetch=0,
            grid=grid,
            in_specs=[
                pl.BlockSpec((b, tile_n), in_map),
                pl.BlockSpec((b, tile_n), in_map),
            ],
            out_specs=out_spec,
            scratch_shapes=[pltpu.VMEM((1, sub), jnp.float32)],
        ),
        compiler_params=pltpu.CompilerParams(
            dimension_semantics=dim_sem,
            vmem_limit_bytes=vmem_limit),
        cost_estimate=cost,
    )(x2, y2)

    return jnp.float32(1.0) - jnp.sum(partials) / jnp.float32(n)


def _reference(x, y):
    b = x.shape[0]
    x2 = x.reshape(b, -1).astype(jnp.float32)
    y2 = y.reshape(b, -1).astype(jnp.float32)
    vx = x2 - jnp.mean(x2, axis=0, keepdims=True)
    vy = y2 - jnp.mean(y2, axis=0, keepdims=True)
    cor = jnp.sum(vx * vy, axis=0) / (
        jnp.sqrt(jnp.sum(vx ** 2, axis=0) * jnp.sum(vy ** 2, axis=0)) + 1e-6)
    return 1.0 - jnp.mean(cor)


if __name__ == "__main__":
    key = jax.random.PRNGKey(0)
    kx, ky = jax.random.split(key)

    # Small NCHW shapes consistent with the module's generic forward.
    x = jax.random.normal(kx, (2, 4, 16, 16), dtype=jnp.float32)
    y = jax.random.normal(ky, (2, 4, 16, 16), dtype=jnp.float32)
    out = jax.block_until_ready(correlation_loss(x, y))
    ref = jax.block_until_ready(_reference(x, y))
    assert jnp.allclose(out, ref, atol=1e-5, rtol=1e-5), (out, ref)

    # Ragged feature dim (exercises the cdiv grid + final-tile lane mask).
    xr = jax.random.normal(kx, (2, 3, 10, 10), dtype=jnp.float32)
    yr = jax.random.normal(ky, (2, 3, 10, 10), dtype=jnp.float32)
    out_r = jax.block_until_ready(correlation_loss(xr, yr))
    ref_r = jax.block_until_ready(_reference(xr, yr))
    assert jnp.allclose(out_r, ref_r, atol=1e-5, rtol=1e-5), (out_r, ref_r)

    # Larger batch (exercises the chunked-B two-pass path, incl. a remainder
    # chunk of 8 rows), still a small problem overall.
    xb = jax.random.normal(kx, (72, 3, 5, 7), dtype=jnp.float32)
    yb = jax.random.normal(ky, (72, 3, 5, 7), dtype=jnp.float32)
    out_b = jax.block_until_ready(correlation_loss(xb, yb))
    ref_b = jax.block_until_ready(_reference(xb, yb))
    assert jnp.allclose(out_b, ref_b, atol=1e-5, rtol=1e-5), (out_b, ref_b)

    print("KERNEL_OK")
</pallas_src>

<mosaic_0001>
module attributes {stable_mosaic.version = 11 : i64} {
  func.func @_corr_kernel(%arg0: i32, %arg1: memref<2x1024xf32, #tpu.memory_space<vmem>>, %arg2: memref<2x1024xf32, #tpu.memory_space<vmem>>, %arg3: memref<1x1xf32, #tpu.memory_space<smem>>, %arg4: memref<1x512xf32, #tpu.memory_space<vmem>>) attributes {dimension_semantics = [#tpu.dimension_semantics<arbitrary>], iteration_bounds = array<i64: 1>, scalar_prefetch = 0 : i64, scratch_operands = 1 : i64, tpu.core_type = #tpu.core_type<tc>, window_params = [{transform_indices = @transform_0, window_bounds = array<i64: 2, 1024>}, {transform_indices = @transform_1, window_bounds = array<i64: 2, 1024>}, {transform_indices = @transform_2, window_bounds = array<i64: 1, 1>}]} {
    %c0_i32 = arith.constant 0 : i32
    %0 = arith.cmpi eq, %arg0, %c0_i32 : i32
    %1 = arith.extui %0 : i1 to i32
    %c0_i32_0 = arith.constant 0 : i32
    %2 = arith.cmpi ne, %1, %c0_i32_0 : i32
    scf.if %2 {
      %cst_28 = arith.constant 0.000000e+00 : f32
      %76 = vector.broadcast %cst_28 : f32 to vector<1x512xf32>
      %c0_29 = arith.constant 0 : index
      %c0_30 = arith.constant 0 : index
      %77 = vector.load %arg4[%c0_29, %c0_30] : memref<1x512xf32, #tpu.memory_space<vmem>>, vector<1x512xf32>
      tpu.vector_store %arg4[%c0_29, %c0_30], %76 {strides = array<i32>} : memref<1x512xf32, #tpu.memory_space<vmem>>, vector<1x512xf32>,
    } else {
    }
    %c0 = arith.constant 0 : index
    %c0_1 = arith.constant 0 : index
    %3 = vector.load %arg4[%c0, %c0_1] : memref<1x512xf32, #tpu.memory_space<vmem>>, vector<1x512xf32>
    %cst = arith.constant 0.000000e+00 : f32
    %4 = vector.broadcast %cst : f32 to vector<1x512xf32>
    %c0_i32_2 = arith.constant 0 : i32
    %c512_i32 = arith.constant 512 : i32
    %5 = arith.muli %c0_i32_2, %c512_i32 : i32
    %6 = tpu.assume_multiple %5, 512 : i32
    %c0_3 = arith.constant 0 : index
    %7 = arith.index_cast %6 : i32 to index
    %8 = vector.load %arg1[%c0_3, %7] : memref<2x1024xf32, #tpu.memory_space<vmem>>, vector<2x512xf32>
    %c0_4 = arith.constant 0 : index
    %9 = arith.index_cast %6 : i32 to index
    %10 = vector.load %arg2[%c0_4, %9] : memref<2x1024xf32, #tpu.memory_space<vmem>>, vector<2x512xf32>
    %cst_5 = arith.constant dense<0.000000e+00> : vector<512xf32>
    %11 = vector.multi_reduction <add>, %8, %cst_5 [0] : vector<2x512xf32> to vector<512xf32>
    %12 = vector.shape_cast %11 : vector<512xf32> to vector<1x512xf32>
    %cst_6 = arith.constant 2.000000e+00 : f32
    %13 = vector.broadcast %cst_6 : f32 to vector<1x512xf32>
    %14 = arith.divf %12, %13 : vector<1x512xf32>
    %15 = vector.broadcast %14 : vector<1x512xf32> to vector<2x512xf32>
    %16 = arith.subf %8, %15 : vector<2x512xf32>
    %cst_7 = arith.constant dense<0.000000e+00> : vector<512xf32>
    %17 = vector.multi_reduction <add>, %10, %cst_7 [0] : vector<2x512xf32> to vector<512xf32>
    %18 = vector.shape_cast %17 : vector<512xf32> to vector<1x512xf32>
    %cst_8 = arith.constant 2.000000e+00 : f32
    %19 = vector.broadcast %cst_8 : f32 to vector<1x512xf32>
    %20 = arith.divf %18, %19 : vector<1x512xf32>
    %21 = vector.broadcast %20 : vector<1x512xf32> to vector<2x512xf32>
    %22 = arith.subf %10, %21 : vector<2x512xf32>
    %23 = arith.mulf %16, %22 : vector<2x512xf32>
    %cst_9 = arith.constant dense<0.000000e+00> : vector<512xf32>
    %24 = vector.multi_reduction <add>, %23, %cst_9 [0] : vector<2x512xf32> to vector<512xf32>
    %25 = vector.shape_cast %24 : vector<512xf32> to vector<1x512xf32>
    %26 = arith.mulf %16, %16 : vector<2x512xf32>
    %cst_10 = arith.constant dense<0.000000e+00> : vector<512xf32>
    %27 = vector.multi_reduction <add>, %26, %cst_10 [0] : vector<2x512xf32> to vector<512xf32>
    %28 = vector.shape_cast %27 : vector<512xf32> to vector<1x512xf32>
    %29 = arith.mulf %22, %22 : vector<2x512xf32>
    %cst_11 = arith.constant dense<0.000000e+00> : vector<512xf32>
    %30 = vector.multi_reduction <add>, %29, %cst_11 [0] : vector<2x512xf32> to vector<512xf32>
    %31 = vector.shape_cast %30 : vector<512xf32> to vector<1x512xf32>
    %32 = arith.mulf %28, %31 : vector<1x512xf32>
    %33 = math.sqrt %32 : vector<1x512xf32>
    %cst_12 = arith.constant 9.99999997E-7 : f32
    %34 = vector.broadcast %cst_12 : f32 to vector<1x512xf32>
    %35 = arith.addf %33, %34 : vector<1x512xf32>
    %36 = arith.divf %25, %35 : vector<1x512xf32>
    %37 = arith.addf %4, %36 : vector<1x512xf32>
    %c1_i32 = arith.constant 1 : i32
    %c512_i32_13 = arith.constant 512 : i32
    %38 = arith.muli %c1_i32, %c512_i32_13 : i32
    %39 = tpu.assume_multiple %38, 512 : i32
    %c0_14 = arith.constant 0 : index
    %40 = arith.index_cast %39 : i32 to index
    %41 = vector.load %arg1[%c0_14, %40] : memref<2x1024xf32, #tpu.memory_space<vmem>>, vector<2x512xf32>
    %c0_15 = arith.constant 0 : index
    %42 = arith.index_cast %39 : i32 to index
    %43 = vector.load %arg2[%c0_15, %42] : memref<2x1024xf32, #tpu.memory_space<vmem>>, vector<2x512xf32>
    %cst_16 = arith.constant dense<0.000000e+00> : vector<512xf32>
    %44 = vector.multi_reduction <add>, %41, %cst_16 [0] : vector<2x512xf32> to vector<512xf32>
    %45 = vector.shape_cast %44 : vector<512xf32> to vector<1x512xf32>
    %cst_17 = arith.constant 2.000000e+00 : f32
    %46 = vector.broadcast %cst_17 : f32 to vector<1x512xf32>
    %47 = arith.divf %45, %46 : vector<1x512xf32>
    %48 = vector.broadcast %47 : vector<1x512xf32> to vector<2x512xf32>
    %49 = arith.subf %41, %48 : vector<2x512xf32>
    %cst_18 = arith.constant dense<0.000000e+00> : vector<512xf32>
    %50 = vector.multi_reduction <add>, %43, %cst_18 [0] : vector<2x512xf32> to vector<512xf32>
    %51 = vector.shape_cast %50 : vector<512xf32> to vector<1x512xf32>
    %cst_19 = arith.constant 2.000000e+00 : f32
    %52 = vector.broadcast %cst_19 : f32 to vector<1x512xf32>
    %53 = arith.divf %51, %52 : vector<1x512xf32>
    %54 = vector.broadcast %53 : vector<1x512xf32> to vector<2x512xf32>
    %55 = arith.subf %43, %54 : vector<2x512xf32>
    %56 = arith.mulf %49, %55 : vector<2x512xf32>
    %cst_20 = arith.constant dense<0.000000e+00> : vector<512xf32>
    %57 = vector.multi_reduction <add>, %56, %cst_20 [0] : vector<2x512xf32> to vector<512xf32>
    %58 = vector.shape_cast %57 : vector<512xf32> to vector<1x512xf32>
    %59 = arith.mulf %49, %49 : vector<2x512xf32>
    %cst_21 = arith.constant dense<0.000000e+00> : vector<512xf32>
    %60 = vector.multi_reduction <add>, %59, %cst_21 [0] : vector<2x512xf32> to vector<512xf32>
    %61 = vector.shape_cast %60 : vector<512xf32> to vector<1x512xf32>
    %62 = arith.mulf %55, %55 : vector<2x512xf32>
    %cst_22 = arith.constant dense<0.000000e+00> : vector<512xf32>
    %63 = vector.multi_reduction <add>, %62, %cst_22 [0] : vector<2x512xf32> to vector<512xf32>
    %64 = vector.shape_cast %63 : vector<512xf32> to vector<1x512xf32>
    %65 = arith.mulf %61, %64 : vector<1x512xf32>
    %66 = math.sqrt %65 : vector<1x512xf32>
    %cst_23 = arith.constant 9.99999997E-7 : f32
    %67 = vector.broadcast %cst_23 : f32 to vector<1x512xf32>
    %68 = arith.addf %66, %67 : vector<1x512xf32>
    %69 = arith.divf %58, %68 : vector<1x512xf32>
    %70 = arith.addf %37, %69 : vector<1x512xf32>
    %c2_i32 = arith.constant 2 : i32
    %71 = arith.addf %3, %70 : vector<1x512xf32>
    %c0_24 = arith.constant 0 : index
    %c0_25 = arith.constant 0 : index
    %72 = vector.load %arg4[%c0_24, %c0_25] : memref<1x512xf32, #tpu.memory_space<vmem>>, vector<1x512xf32>
    tpu.vector_store %arg4[%c0_24, %c0_25], %71 {strides = array<i32>} : memref<1x512xf32, #tpu.memory_space<vmem>>, vector<1x512xf32>,
    %c0_i32_26 = arith.constant 0 : i32
    %73 = arith.cmpi eq, %arg0, %c0_i32_26 : i32
    %74 = arith.extui %73 : i1 to i32
    %c0_i32_27 = arith.constant 0 : i32
    %75 = arith.cmpi ne, %74, %c0_i32_27 : i32
    scf.if %75 {
      %c0_28 = arith.constant 0 : index
      %c0_29 = arith.constant 0 : index
      %76 = vector.load %arg4[%c0_28, %c0_29] : memref<1x512xf32, #tpu.memory_space<vmem>>, vector<1x512xf32>
      %77 = vector.shape_cast %76 : vector<1x512xf32> to vector<1x1x512xf32>
      %cst_30 = arith.constant dense<0.000000e+00> : vector<1xf32>
      %78 = vector.multi_reduction <add>, %77, %cst_30 [1, 2] : vector<1x1x512xf32> to vector<1xf32>
      %79 = vector.shape_cast %78 : vector<1xf32> to vector<1x1x1xf32>
      %80 = vector.extract %79[0, 0, 0] : f32 from vector<1x1x1xf32>
      %c0_31 = arith.constant 0 : index
      %c0_32 = arith.constant 0 : index
      %81 = memref.load %arg3[%c0_31, %c0_32] : memref<1x1xf32, #tpu.memory_space<smem>>
      memref.store %80, %arg3[%c0_31, %c0_32] : memref<1x1xf32, #tpu.memory_space<smem>>
    } else {
    }
    return
  }
  func.func @transform_0(%arg0: i32) -> (i32, i32) {
    %c0_i32 = arith.constant 0 : i32
    %c0_i32_0 = arith.constant 0 : i32
    return %c0_i32, %arg0 : i32, i32
  }
  func.func @transform_1(%arg0: i32) -> (i32, i32) {
    %c0_i32 = arith.constant 0 : i32
    %c0_i32_0 = arith.constant 0 : i32
    return %c0_i32, %arg0 : i32, i32
  }
  func.func @transform_2(%arg0: i32) -> (i32, i32) {
    %c0_i32 = arith.constant 0 : i32
    %c0_i32_0 = arith.constant 0 : i32
    %c0_i32_1 = arith.constant 0 : i32
    return %c0_i32, %c0_i32_0 : i32, i32
  }
}

</mosaic_0001>

<llo_original>
// kernel: tpu_custom_call.1
$region0: #{tpu_custom_call.1}
  #allocation0 [shape = 'u32[]', space=smem, size = 0x4, offset = 0x4, fixed_abs, tag = 'smem constant byte address 0x4 - core index']
  #allocation1 [shape = 'u32[144,128]{1,0:T(1,128)}', space=vmem, size = 0x12000, scoped, tag = 'internal scratch']
  #allocation2 [shape = 'f32[1,512]{1,0:T(1,128)}', space=vmem, size = 0x800, scoped, tag = 'scratch operand']
  %s0 = inlined_call_operand.hbm [shape: f32[2,1024], index: 0, kind: input, shape index: {}]
  %s1 = inlined_call_operand.hbm [shape: f32[2,1024], index: 1, kind: input, shape index: {}]
  %s2 = inlined_call_operand.hbm [shape: f32[1,1], index: 2, kind: output, shape index: {}]
  %s3 = sld [smem:[#allocation0]]
  $region34: #{tpu_custom_call.1} parent=0
    _
  %s5 = ssub.s32 1, %s3
  %s6 = scalar_select 0, %s5, %s3
  $region1: #{tpu_custom_call.1} parent=0
    #allocation3 [shape = 'u8[8192]{0}', space=vmem, size = 0x2000, scoped, tag = 'input window, operand 0, single buffered']
    #allocation4 [shape = 's32[1]{0}', space=sflag, size = 0x4, scoped, tag = 'scoped memory for tpu_custom_call.1']
    #allocation5 [shape = 's32[1]{0}', space=sflag, size = 0x4, scoped, tag = 'scoped memory for tpu_custom_call.1']
    #allocation6 [shape = 'u8[8192]{0}', space=vmem, size = 0x2000, scoped, tag = 'input window, operand 1, single buffered']
    #allocation7 [shape = 's32[1]{0}', space=sflag, size = 0x4, scoped, tag = 'scoped memory for tpu_custom_call.1']
    #allocation8 [shape = 'u8[512]{0}', space=smem, size = 0x200, scoped, tag = 'output window, operand 0, single buffered']
    %7 = vsyncpa [#allocation4], 0
    %8 = vsyncpa [#allocation7], 0
    %9 = vsyncpa [#allocation5], 0
    // Predicated region
    $region2: #{tpu_custom_call.1} parent=1 // pred_check
      _
    $region3: #{tpu_custom_call.1} parent=1 // pred_check_branch
      %11 = sbr.rel (0) target = $region5
    $region4: #{tpu_custom_call.1} parent=1 // pred_region
      %s13 = ssub.s32 256, 256
      %14 = vsyncadd [#allocation4], %s13
      %s16 = sshll.u32 [#allocation3], 4
      %s17 = int_to_ptr.vmem [resolvable:$true] %s16
      %19 = dma.hbm_to_vmem [thread:$0]  %s0, 256, %s17, [#allocation4]
    $region5: #{tpu_custom_call.1} parent=1 // pred_fallthru
      _
    // Predicated region
    $region6: #{tpu_custom_call.1} parent=1 // pred_check
      _
    $region7: #{tpu_custom_call.1} parent=1 // pred_check_branch
      %21 = sbr.rel (0) target = $region9
    $region8: #{tpu_custom_call.1} parent=1 // pred_region
      %s23 = ssub.s32 256, 256
      %24 = vsyncadd [#allocation7], %s23
      %s26 = sshll.u32 [#allocation6], 4
      %s27 = int_to_ptr.vmem [resolvable:$true] %s26
      %29 = dma.hbm_to_vmem [thread:$0]  %s1, 256, %s27, [#allocation7]
    $region9: #{tpu_custom_call.1} parent=1 // pred_fallthru
      _
    // Predicated region
    $region10: #{tpu_custom_call.1} parent=1 // pred_check
      _
    $region11: #{tpu_custom_call.1} parent=1 // pred_check_branch
      %31 = sbr.rel (0) target = $region13
    $region12: #{tpu_custom_call.1} parent=1 // pred_region
      %32 = dma.done [#allocation4], 256
    $region13: #{tpu_custom_call.1} parent=1 // pred_fallthru
      _
    // Predicated region
    $region14: #{tpu_custom_call.1} parent=1 // pred_check
      _
    $region15: #{tpu_custom_call.1} parent=1 // pred_check_branch
      %34 = sbr.rel (0) target = $region17
    $region16: #{tpu_custom_call.1} parent=1 // pred_region
      %35 = dma.done [#allocation7], 256
    $region17: #{tpu_custom_call.1} parent=1 // pred_fallthru
      _
    %p36 = scmp.eq.s32.totalorder 0, 0
    // Predicated region
    $region18: #{tpu_custom_call.1} parent=1 // pred_check
      %p37 = pneg %p36
    $region19: #{tpu_custom_call.1} parent=1 // pred_check_branch
      %39 = sbr.rel (%p37) target = $region21
    $region20: #{tpu_custom_call.1} parent=1 // pred_region
      %v40 = vlaneseq
      %vm41 = vcmp.ge.s32.totalorder %v40, 0
      %vm42 = vcmp.lt.s32.totalorder %v40, 512
      %vm43 = vmand %vm41, %vm42
      %44 = vst.msk [vmem:[#allocation2] sm:$0xf] %vm43, 0.0
    $region21: #{tpu_custom_call.1} parent=1 // pred_fallthru
      _
    %v45 = vld [vmem:[#allocation2] sm:$0xf]
    %v46 = vld [vmem:[#allocation3] sm:$0xff]
    %v47 = vld [vmem:[#allocation6] sm:$0xff]
    %v49 = vcombine.high %v46, %v46
    %v51 = vunpack.c.l.s4 1983009808
    %v52 = vunpack.c.0.s8 %v51
    %v53 = vlaneseq
    %v54 = vshrl.u32 %v53, 7
    %v55 = vsub.s32 %v52, %v54
    %v56 = vrot.slane %v46, %v55
    %v58 = vunpack.c.l.s4 1983009808
    %v59 = vunpack.c.0.s8 %v58
    %v60 = vlaneseq
    %v61 = vshrl.u32 %v60, 7
    %v62 = vsub.s32 %v59, %v61
    %v63 = vrot.slane %v49, %v62
    %v64 = vcombine.high %v56, %v56
    %v65 = vcombine.high %v63, %v63
    %vm70 = vcmask 1041408
    %v71 = vsel %vm70, %v56, 0.0
    %v72 = vrot.slane %v71, 4
    %v73 = vadd.f32 %v71, %v72
    %v74 = vrot.slane %v73, 2
    %v75 = vadd.f32 %v73, %v74
    %v76 = vrot.slane %v75, 1
    %v77 = vadd.f32 %v75, %v76
    %v78 = vsel %vm70, %v64, 0.0
    %v79 = vrot.slane %v78, 4
    %v80 = vadd.f32 %v78, %v79
    %v81 = vrot.slane %v80, 2
    %v82 = vadd.f32 %v80, %v81
    %v83 = vrot.slane %v82, 1
    %v84 = vadd.f32 %v82, %v83
    %v85 = vsel %vm70, %v63, 0.0
    %v86 = vrot.slane %v85, 4
    %v87 = vadd.f32 %v85, %v86
    %v88 = vrot.slane %v87, 2
    %v89 = vadd.f32 %v87, %v88
    %v90 = vrot.slane %v89, 1
    %v91 = vadd.f32 %v89, %v90
    %v92 = vsel %vm70, %v65, 0.0
    %v93 = vrot.slane %v92, 4
    %v94 = vadd.f32 %v92, %v93
    %v95 = vrot.slane %v94, 2
    %v96 = vadd.f32 %v94, %v95
    %v97 = vrot.slane %v96, 1
    %v98 = vadd.f32 %v96, %v97
    %v99 = vrcp.pop 2.0
    %v100 = vmul.f32 %v77, %v99
    %v101 = vmul.f32 %v84, %v99
    %v102 = vmul.f32 %v91, %v99
    %v103 = vmul.f32 %v98, %v99
    %v108 = vcombine.low %v100, %v101
    %v109 = vcombine.low %v102, %v103
    %v111 = vunpack.c.l.s4 1983009808
    %v112 = vunpack.c.0.s8 %v111
    %v113 = vlaneseq
    %v114 = vshrl.u32 %v113, 7
    %v115 = vsub.s32 %v112, %v114
    %v116 = vrot.slane %v108, %v115
    %v118 = vunpack.c.l.s4 1983009808
    %v119 = vunpack.c.0.s8 %v118
    %v120 = vlaneseq
    %v121 = vshrl.u32 %v120, 7
    %v122 = vsub.s32 %v119, %v121
    %v123 = vrot.slane %v109, %v122
    %v124 = vcombine.low %v116, %v123
    %v126 = vsub.f32 %v46, %v124
    %v128 = vcombine.high %v47, %v47
    %v130 = vunpack.c.l.s4 1983009808
    %v131 = vunpack.c.0.s8 %v130
    %v132 = vlaneseq
    %v133 = vshrl.u32 %v132, 7
    %v134 = vsub.s32 %v131, %v133
    %v135 = vrot.slane %v47, %v134
    %v137 = vunpack.c.l.s4 1983009808
    %v138 = vunpack.c.0.s8 %v137
    %v139 = vlaneseq
    %v140 = vshrl.u32 %v139, 7
    %v141 = vsub.s32 %v138, %v140
    %v142 = vrot.slane %v128, %v141
    %v143 = vcombine.high %v135, %v135
    %v144 = vcombine.high %v142, %v142
    %v149 = vsel %vm70, %v135, 0.0
    %v150 = vrot.slane %v149, 4
    %v151 = vadd.f32 %v149, %v150
    %v152 = vrot.slane %v151, 2
    %v153 = vadd.f32 %v151, %v152
    %v154 = vrot.slane %v153, 1
    %v155 = vadd.f32 %v153, %v154
    %v156 = vsel %vm70, %v143, 0.0
    %v157 = vrot.slane %v156, 4
    %v158 = vadd.f32 %v156, %v157
    %v159 = vrot.slane %v158, 2
    %v160 = vadd.f32 %v158, %v159
    %v161 = vrot.slane %v160, 1
    %v162 = vadd.f32 %v160, %v161
    %v163 = vsel %vm70, %v142, 0.0
    %v164 = vrot.slane %v163, 4
    %v165 = vadd.f32 %v163, %v164
    %v166 = vrot.slane %v165, 2
    %v167 = vadd.f32 %v165, %v166
    %v168 = vrot.slane %v167, 1
    %v169 = vadd.f32 %v167, %v168
    %v170 = vsel %vm70, %v144, 0.0
    %v171 = vrot.slane %v170, 4
    %v172 = vadd.f32 %v170, %v171
    %v173 = vrot.slane %v172, 2
    %v174 = vadd.f32 %v172, %v173
    %v175 = vrot.slane %v174, 1
    %v176 = vadd.f32 %v174, %v175
    %v177 = vmul.f32 %v155, %v99
    %v178 = vmul.f32 %v162, %v99
    %v179 = vmul.f32 %v169, %v99
    %v180 = vmul.f32 %v176, %v99
    %v185 = vcombine.low %v177, %v178
    %v186 = vcombine.low %v179, %v180
    %v188 = vunpack.c.l.s4 1983009808
    %v189 = vunpack.c.0.s8 %v188
    %v190 = vlaneseq
    %v191 = vshrl.u32 %v190, 7
    %v192 = vsub.s32 %v189, %v191
    %v193 = vrot.slane %v185, %v192
    %v195 = vunpack.c.l.s4 1983009808
    %v196 = vunpack.c.0.s8 %v195
    %v197 = vlaneseq
    %v198 = vshrl.u32 %v197, 7
    %v199 = vsub.s32 %v196, %v198
    %v200 = vrot.slane %v186, %v199
    %v201 = vcombine.low %v193, %v200
    %v203 = vsub.f32 %v47, %v201
    %v204 = vmul.f32 %v126, %v203
    %v206 = vcombine.high %v204, %v204
    %v208 = vunpack.c.l.s4 1983009808
    %v209 = vunpack.c.0.s8 %v208
    %v210 = vlaneseq
    %v211 = vshrl.u32 %v210, 7
    %v212 = vsub.s32 %v209, %v211
    %v213 = vrot.slane %v204, %v212
    %v215 = vunpack.c.l.s4 1983009808
    %v216 = vunpack.c.0.s8 %v215
    %v217 = vlaneseq
    %v218 = vshrl.u32 %v217, 7
    %v219 = vsub.s32 %v216, %v218
    %v220 = vrot.slane %v206, %v219
    %v221 = vcombine.high %v213, %v213
    %v222 = vcombine.high %v220, %v220
    %v227 = vsel %vm70, %v213, 0.0
    %v228 = vrot.slane %v227, 4
    %v229 = vadd.f32 %v227, %v228
    %v230 = vrot.slane %v229, 2
    %v231 = vadd.f32 %v229, %v230
    %v232 = vrot.slane %v231, 1
    %v233 = vadd.f32 %v231, %v232
    %v234 = vsel %vm70, %v221, 0.0
    %v235 = vrot.slane %v234, 4
    %v236 = vadd.f32 %v234, %v235
    %v237 = vrot.slane %v236, 2
    %v238 = vadd.f32 %v236, %v237
    %v239 = vrot.slane %v238, 1
    %v240 = vadd.f32 %v238, %v239
    %v241 = vsel %vm70, %v220, 0.0
    %v242 = vrot.slane %v241, 4
    %v243 = vadd.f32 %v241, %v242
    %v244 = vrot.slane %v243, 2
    %v245 = vadd.f32 %v243, %v244
    %v246 = vrot.slane %v245, 1
    %v247 = vadd.f32 %v245, %v246
    %v248 = vsel %vm70, %v222, 0.0
    %v249 = vrot.slane %v248, 4
    %v250 = vadd.f32 %v248, %v249
    %v251 = vrot.slane %v250, 2
    %v252 = vadd.f32 %v250, %v251
    %v253 = vrot.slane %v252, 1
    %v254 = vadd.f32 %v252, %v253
    %v255 = vmul.f32 %v126, %v126
    %v257 = vcombine.high %v255, %v255
    %v259 = vunpack.c.l.s4 1983009808
    %v260 = vunpack.c.0.s8 %v259
    %v261 = vlaneseq
    %v262 = vshrl.u32 %v261, 7
    %v263 = vsub.s32 %v260, %v262
    %v264 = vrot.slane %v255, %v263
    %v266 = vunpack.c.l.s4 1983009808
    %v267 = vunpack.c.0.s8 %v266
    %v268 = vlaneseq
    %v269 = vshrl.u32 %v268, 7
    %v270 = vsub.s32 %v267, %v269
    %v271 = vrot.slane %v257, %v270
    %v272 = vcombine.high %v264, %v264
    %v273 = vcombine.high %v271, %v271
    %v278 = vsel %vm70, %v264, 0.0
    %v279 = vrot.slane %v278, 4
    %v280 = vadd.f32 %v278, %v279
    %v281 = vrot.slane %v280, 2
    %v282 = vadd.f32 %v280, %v281
    %v283 = vrot.slane %v282, 1
    %v284 = vadd.f32 %v282, %v283
    %v285 = vsel %vm70, %v272, 0.0
    %v286 = vrot.slane %v285, 4
    %v287 = vadd.f32 %v285, %v286
    %v288 = vrot.slane %v287, 2
    %v289 = vadd.f32 %v287, %v288
    %v290 = vrot.slane %v289, 1
    %v291 = vadd.f32 %v289, %v290
    %v292 = vsel %vm70, %v271, 0.0
    %v293 = vrot.slane %v292, 4
    %v294 = vadd.f32 %v292, %v293
    %v295 = vrot.slane %v294, 2
    %v296 = vadd.f32 %v294, %v295
    %v297 = vrot.slane %v296, 1
    %v298 = vadd.f32 %v296, %v297
    %v299 = vsel %vm70, %v273, 0.0
    %v300 = vrot.slane %v299, 4
    %v301 = vadd.f32 %v299, %v300
    %v302 = vrot.slane %v301, 2
    %v303 = vadd.f32 %v301, %v302
    %v304 = vrot.slane %v303, 1
    %v305 = vadd.f32 %v303, %v304
    %v306 = vmul.f32 %v203, %v203
    %v308 = vcombine.high %v306, %v306
    %v310 = vunpack.c.l.s4 1983009808
    %v311 = vunpack.c.0.s8 %v310
    %v312 = vlaneseq
    %v313 = vshrl.u32 %v312, 7
    %v314 = vsub.s32 %v311, %v313
    %v315 = vrot.slane %v306, %v314
    %v317 = vunpack.c.l.s4 1983009808
    %v318 = vunpack.c.0.s8 %v317
    %v319 = vlaneseq
    %v320 = vshrl.u32 %v319, 7
    %v321 = vsub.s32 %v318, %v320
    %v322 = vrot.slane %v308, %v321
    %v323 = vcombine.high %v315, %v315
    %v324 = vcombine.high %v322, %v322
    %v329 = vsel %vm70, %v315, 0.0
    %v330 = vrot.slane %v329, 4
    %v331 = vadd.f32 %v329, %v330
    %v332 = vrot.slane %v331, 2
    %v333 = vadd.f32 %v331, %v332
    %v334 = vrot.slane %v333, 1
    %v335 = vadd.f32 %v333, %v334
    %v336 = vsel %vm70, %v323, 0.0
    %v337 = vrot.slane %v336, 4
    %v338 = vadd.f32 %v336, %v337
    %v339 = vrot.slane %v338, 2
    %v340 = vadd.f32 %v338, %v339
    %v341 = vrot.slane %v340, 1
    %v342 = vadd.f32 %v340, %v341
    %v343 = vsel %vm70, %v322, 0.0
    %v344 = vrot.slane %v343, 4
    %v345 = vadd.f32 %v343, %v344
    %v346 = vrot.slane %v345, 2
    %v347 = vadd.f32 %v345, %v346
    %v348 = vrot.slane %v347, 1
    %v349 = vadd.f32 %v347, %v348
    %v350 = vsel %vm70, %v324, 0.0
    %v351 = vrot.slane %v350, 4
    %v352 = vadd.f32 %v350, %v351
    %v353 = vrot.slane %v352, 2
    %v354 = vadd.f32 %v352, %v353
    %v355 = vrot.slane %v354, 1
    %v356 = vadd.f32 %v354, %v355
    %v357 = vmul.f32 %v284, %v335
    %v358 = vmul.f32 %v291, %v342
    %v359 = vmul.f32 %v298, %v349
    %v360 = vmul.f32 %v305, %v356
    %v361 = vrsqrt.pop %v357
    %v362 = vmul.f32 %v357, %v361
    %vm363 = vcmp.eq.f32.partialorder %v357, inf
    %v364 = vsel %vm363, %v357, %v362
    %vm365 = vcmp.eq.f32.partialorder %v357, 0.0
    %v366 = vand.u32 %v357, 2147483648
    %v367 = vsel %vm365, %v366, %v364
    %v368 = vrsqrt.pop %v358
    %v369 = vmul.f32 %v358, %v368
    %vm370 = vcmp.eq.f32.partialorder %v358, inf
    %v371 = vsel %vm370, %v358, %v369
    %vm372 = vcmp.eq.f32.partialorder %v358, 0.0
    %v373 = vand.u32 %v358, 2147483648
    %v374 = vsel %vm372, %v373, %v371
    %v375 = vrsqrt.pop %v359
    %v376 = vmul.f32 %v359, %v375
    %vm377 = vcmp.eq.f32.partialorder %v359, inf
    %v378 = vsel %vm377, %v359, %v376
    %vm379 = vcmp.eq.f32.partialorder %v359, 0.0
    %v380 = vand.u32 %v359, 2147483648
    %v381 = vsel %vm379, %v380, %v378
    %v382 = vrsqrt.pop %v360
    %v383 = vmul.f32 %v360, %v382
    %vm384 = vcmp.eq.f32.partialorder %v360, inf
    %v385 = vsel %vm384, %v360, %v383
    %vm386 = vcmp.eq.f32.partialorder %v360, 0.0
    %v387 = vand.u32 %v360, 2147483648
    %v388 = vsel %vm386, %v387, %v385
    %v389 = vadd.f32 %v367, 1e-06
    %v390 = vadd.f32 %v374, 1e-06
    %v391 = vadd.f32 %v381, 1e-06
    %v392 = vadd.f32 %v388, 1e-06
    %v393 = vrcp.pop %v389
    %v394 = vmul.f32 %v233, %v393
    %v395 = vrcp.pop %v390
    %v396 = vmul.f32 %v240, %v395
    %v397 = vrcp.pop %v391
    %v398 = vmul.f32 %v247, %v397
    %v399 = vrcp.pop %v392
    %v400 = vmul.f32 %v254, %v399
    %v401 = vadd.f32 %v394, 0.0
    %v402 = vadd.f32 %v396, 0.0
    %v403 = vadd.f32 %v398, 0.0
    %v404 = vadd.f32 %v400, 0.0
    %s405 = scalar_lea.vmem [#allocation3], 8
    %v406 = vld [vmem:[%s405] sm:$0xff]
    %s407 = scalar_lea.vmem [#allocation6], 8
    %v408 = vld [vmem:[%s407] sm:$0xff]
    %v410 = vcombine.high %v406, %v406
    %v412 = vunpack.c.l.s4 1983009808
    %v413 = vunpack.c.0.s8 %v412
    %v414 = vlaneseq
    %v415 = vshrl.u32 %v414, 7
    %v416 = vsub.s32 %v413, %v415
    %v417 = vrot.slane %v406, %v416
    %v419 = vunpack.c.l.s4 1983009808
    %v420 = vunpack.c.0.s8 %v419
    %v421 = vlaneseq
    %v422 = vshrl.u32 %v421, 7
    %v423 = vsub.s32 %v420, %v422
    %v424 = vrot.slane %v410, %v423
    %v425 = vcombine.high %v417, %v417
    %v426 = vcombine.high %v424, %v424
    %v431 = vsel %vm70, %v417, 0.0
    %v432 = vrot.slane %v431, 4
    %v433 = vadd.f32 %v431, %v432
    %v434 = vrot.slane %v433, 2
    %v435 = vadd.f32 %v433, %v434
    %v436 = vrot.slane %v435, 1
    %v437 = vadd.f32 %v435, %v436
    %v438 = vsel %vm70, %v425, 0.0
    %v439 = vrot.slane %v438, 4
    %v440 = vadd.f32 %v438, %v439
    %v441 = vrot.slane %v440, 2
    %v442 = vadd.f32 %v440, %v441
    %v443 = vrot.slane %v442, 1
    %v444 = vadd.f32 %v442, %v443
    %v445 = vsel %vm70, %v424, 0.0
    %v446 = vrot.slane %v445, 4
    %v447 = vadd.f32 %v445, %v446
    %v448 = vrot.slane %v447, 2
    %v449 = vadd.f32 %v447, %v448
    %v450 = vrot.slane %v449, 1
    %v451 = vadd.f32 %v449, %v450
    %v452 = vsel %vm70, %v426, 0.0
    %v453 = vrot.slane %v452, 4
    %v454 = vadd.f32 %v452, %v453
    %v455 = vrot.slane %v454, 2
    %v456 = vadd.f32 %v454, %v455
    %v457 = vrot.slane %v456, 1
    %v458 = vadd.f32 %v456, %v457
    %v459 = vmul.f32 %v437, %v99
    %v460 = vmul.f32 %v444, %v99
    %v461 = vmul.f32 %v451, %v99
    %v462 = vmul.f32 %v458, %v99
    %v467 = vcombine.low %v459, %v460
    %v468 = vcombine.low %v461, %v462
    %v470 = vunpack.c.l.s4 1983009808
    %v471 = vunpack.c.0.s8 %v470
    %v472 = vlaneseq
    %v473 = vshrl.u32 %v472, 7
    %v474 = vsub.s32 %v471, %v473
    %v475 = vrot.slane %v467, %v474
    %v477 = vunpack.c.l.s4 1983009808
    %v478 = vunpack.c.0.s8 %v477
    %v479 = vlaneseq
    %v480 = vshrl.u32 %v479, 7
    %v481 = vsub.s32 %v478, %v480
    %v482 = vrot.slane %v468, %v481
    %v483 = vcombine.low %v475, %v482
    %v485 = vsub.f32 %v406, %v483
    %v487 = vcombine.high %v408, %v408
    %v489 = vunpack.c.l.s4 1983009808
    %v490 = vunpack.c.0.s8 %v489
    %v491 = vlaneseq
    %v492 = vshrl.u32 %v491, 7
    %v493 = vsub.s32 %v490, %v492
    %v494 = vrot.slane %v408, %v493
    %v496 = vunpack.c.l.s4 1983009808
    %v497 = vunpack.c.0.s8 %v496
    %v498 = vlaneseq
    %v499 = vshrl.u32 %v498, 7
    %v500 = vsub.s32 %v497, %v499
    %v501 = vrot.slane %v487, %v500
    %v502 = vcombine.high %v494, %v494
    %v503 = vcombine.high %v501, %v501
    %v508 = vsel %vm70, %v494, 0.0
    %v509 = vrot.slane %v508, 4
    %v510 = vadd.f32 %v508, %v509
    %v511 = vrot.slane %v510, 2
    %v512 = vadd.f32 %v510, %v511
    %v513 = vrot.slane %v512, 1
    %v514 = vadd.f32 %v512, %v513
    %v515 = vsel %vm70, %v502, 0.0
    %v516 = vrot.slane %v515, 4
    %v517 = vadd.f32 %v515, %v516
    %v518 = vrot.slane %v517, 2
    %v519 = vadd.f32 %v517, %v518
    %v520 = vrot.slane %v519, 1
    %v521 = vadd.f32 %v519, %v520
    %v522 = vsel %vm70, %v501, 0.0
    %v523 = vrot.slane %v522, 4
    %v524 = vadd.f32 %v522, %v523
    %v525 = vrot.slane %v524, 2
    %v526 = vadd.f32 %v524, %v525
    %v527 = vrot.slane %v526, 1
    %v528 = vadd.f32 %v526, %v527
    %v529 = vsel %vm70, %v503, 0.0
    %v530 = vrot.slane %v529, 4
    %v531 = vadd.f32 %v529, %v530
    %v532 = vrot.slane %v531, 2
    %v533 = vadd.f32 %v531, %v532
    %v534 = vrot.slane %v533, 1
    %v535 = vadd.f32 %v533, %v534
    %v536 = vmul.f32 %v514, %v99
    %v537 = vmul.f32 %v521, %v99
    %v538 = vmul.f32 %v528, %v99
    %v539 = vmul.f32 %v535, %v99
    %v544 = vcombine.low %v536, %v537
    %v545 = vcombine.low %v538, %v539
    %v547 = vunpack.c.l.s4 1983009808
    %v548 = vunpack.c.0.s8 %v547
    %v549 = vlaneseq
    %v550 = vshrl.u32 %v549, 7
    %v551 = vsub.s32 %v548, %v550
    %v552 = vrot.slane %v544, %v551
    %v554 = vunpack.c.l.s4 1983009808
    %v555 = vunpack.c.0.s8 %v554
    %v556 = vlaneseq
    %v557 = vshrl.u32 %v556, 7
    %v558 = vsub.s32 %v555, %v557
    %v559 = vrot.slane %v545, %v558
    %v560 = vcombine.low %v552, %v559
    %v562 = vsub.f32 %v408, %v560
    %v563 = vmul.f32 %v485, %v562
    %v565 = vcombine.high %v563, %v563
    %v567 = vunpack.c.l.s4 1983009808
    %v568 = vunpack.c.0.s8 %v567
    %v569 = vlaneseq
    %v570 = vshrl.u32 %v569, 7
    %v571 = vsub.s32 %v568, %v570
    %v572 = vrot.slane %v563, %v571
    %v574 = vunpack.c.l.s4 1983009808
    %v575 = vunpack.c.0.s8 %v574
    %v576 = vlaneseq
    %v577 = vshrl.u32 %v576, 7
    %v578 = vsub.s32 %v575, %v577
    %v579 = vrot.slane %v565, %v578
    %v580 = vcombine.high %v572, %v572
    %v581 = vcombine.high %v579, %v579
    %v586 = vsel %vm70, %v572, 0.0
    %v587 = vrot.slane %v586, 4
    %v588 = vadd.f32 %v586, %v587
    %v589 = vrot.slane %v588, 2
    %v590 = vadd.f32 %v588, %v589
    %v591 = vrot.slane %v590, 1
    %v592 = vadd.f32 %v590, %v591
    %v593 = vsel %vm70, %v580, 0.0
    %v594 = vrot.slane %v593, 4
    %v595 = vadd.f32 %v593, %v594
    %v596 = vrot.slane %v595, 2
    %v597 = vadd.f32 %v595, %v596
    %v598 = vrot.slane %v597, 1
    %v599 = vadd.f32 %v597, %v598
    %v600 = vsel %vm70, %v579, 0.0
    %v601 = vrot.slane %v600, 4
    %v602 = vadd.f32 %v600, %v601
    %v603 = vrot.slane %v602, 2
    %v604 = vadd.f32 %v602, %v603
    %v605 = vrot.slane %v604, 1
    %v606 = vadd.f32 %v604, %v605
    %v607 = vsel %vm70, %v581, 0.0
    %v608 = vrot.slane %v607, 4
    %v609 = vadd.f32 %v607, %v608
    %v610 = vrot.slane %v609, 2
    %v611 = vadd.f32 %v609, %v610
    %v612 = vrot.slane %v611, 1
    %v613 = vadd.f32 %v611, %v612
    %v614 = vmul.f32 %v485, %v485
    %v616 = vcombine.high %v614, %v614
    %v618 = vunpack.c.l.s4 1983009808
    %v619 = vunpack.c.0.s8 %v618
    %v620 = vlaneseq
    %v621 = vshrl.u32 %v620, 7
    %v622 = vsub.s32 %v619, %v621
    %v623 = vrot.slane %v614, %v622
    %v625 = vunpack.c.l.s4 1983009808
    %v626 = vunpack.c.0.s8 %v625
    %v627 = vlaneseq
    %v628 = vshrl.u32 %v627, 7
    %v629 = vsub.s32 %v626, %v628
    %v630 = vrot.slane %v616, %v629
    %v631 = vcombine.high %v623, %v623
    %v632 = vcombine.high %v630, %v630
    %v637 = vsel %vm70, %v623, 0.0
    %v638 = vrot.slane %v637, 4
    %v639 = vadd.f32 %v637, %v638
    %v640 = vrot.slane %v639, 2
    %v641 = vadd.f32 %v639, %v640
    %v642 = vrot.slane %v641, 1
    %v643 = vadd.f32 %v641, %v642
    %v644 = vsel %vm70, %v631, 0.0
    %v645 = vrot.slane %v644, 4
    %v646 = vadd.f32 %v644, %v645
    %v647 = vrot.slane %v646, 2
    %v648 = vadd.f32 %v646, %v647
    %v649 = vrot.slane %v648, 1
    %v650 = vadd.f32 %v648, %v649
    %v651 = vsel %vm70, %v630, 0.0
    %v652 = vrot.slane %v651, 4
    %v653 = vadd.f32 %v651, %v652
    %v654 = vrot.slane %v653, 2
    %v655 = vadd.f32 %v653, %v654
    %v656 = vrot.slane %v655, 1
    %v657 = vadd.f32 %v655, %v656
    %v658 = vsel %vm70, %v632, 0.0
    %v659 = vrot.slane %v658, 4
    %v660 = vadd.f32 %v658, %v659
    %v661 = vrot.slane %v660, 2
    %v662 = vadd.f32 %v660, %v661
    %v663 = vrot.slane %v662, 1
    %v664 = vadd.f32 %v662, %v663
    %v665 = vmul.f32 %v562, %v562
    %v667 = vcombine.high %v665, %v665
    %v669 = vunpack.c.l.s4 1983009808
    %v670 = vunpack.c.0.s8 %v669
    %v671 = vlaneseq
    %v672 = vshrl.u32 %v671, 7
    %v673 = vsub.s32 %v670, %v672
    %v674 = vrot.slane %v665, %v673
    %v676 = vunpack.c.l.s4 1983009808
    %v677 = vunpack.c.0.s8 %v676
    %v678 = vlaneseq
    %v679 = vshrl.u32 %v678, 7
    %v680 = vsub.s32 %v677, %v679
    %v681 = vrot.slane %v667, %v680
    %v682 = vcombine.high %v674, %v674
    %v683 = vcombine.high %v681, %v681
    %v688 = vsel %vm70, %v674, 0.0
    %v689 = vrot.slane %v688, 4
    %v690 = vadd.f32 %v688, %v689
    %v691 = vrot.slane %v690, 2
    %v692 = vadd.f32 %v690, %v691
    %v693 = vrot.slane %v692, 1
    %v694 = vadd.f32 %v692, %v693
    %v695 = vsel %vm70, %v682, 0.0
    %v696 = vrot.slane %v695, 4
    %v697 = vadd.f32 %v695, %v696
    %v698 = vrot.slane %v697, 2
    %v699 = vadd.f32 %v697, %v698
    %v700 = vrot.slane %v699, 1
    %v701 = vadd.f32 %v699, %v700
    %v702 = vsel %vm70, %v681, 0.0
    %v703 = vrot.slane %v702, 4
    %v704 = vadd.f32 %v702, %v703
    %v705 = vrot.slane %v704, 2
    %v706 = vadd.f32 %v704, %v705
    %v707 = vrot.slane %v706, 1
    %v708 = vadd.f32 %v706, %v707
    %v709 = vsel %vm70, %v683, 0.0
    %v710 = vrot.slane %v709, 4
    %v711 = vadd.f32 %v709, %v710
    %v712 = vrot.slane %v711, 2
    %v713 = vadd.f32 %v711, %v712
    %v714 = vrot.slane %v713, 1
    %v715 = vadd.f32 %v713, %v714
    %v716 = vmul.f32 %v643, %v694
    %v717 = vmul.f32 %v650, %v701
    %v718 = vmul.f32 %v657, %v708
    %v719 = vmul.f32 %v664, %v715
    %v720 = vrsqrt.pop %v716
    %v721 = vmul.f32 %v716, %v720
    %vm722 = vcmp.eq.f32.partialorder %v716, inf
    %v723 = vsel %vm722, %v716, %v721
    %vm724 = vcmp.eq.f32.partialorder %v716, 0.0
    %v725 = vand.u32 %v716, 2147483648
    %v726 = vsel %vm724, %v725, %v723
    %v727 = vrsqrt.pop %v717
    %v728 = vmul.f32 %v717, %v727
    %vm729 = vcmp.eq.f32.partialorder %v717, inf
    %v730 = vsel %vm729, %v717, %v728
    %vm731 = vcmp.eq.f32.partialorder %v717, 0.0
    %v732 = vand.u32 %v717, 2147483648
    %v733 = vsel %vm731, %v732, %v730
    %v734 = vrsqrt.pop %v718
    %v735 = vmul.f32 %v718, %v734
    %vm736 = vcmp.eq.f32.partialorder %v718, inf
    %v737 = vsel %vm736, %v718, %v735
    %vm738 = vcmp.eq.f32.partialorder %v718, 0.0
    %v739 = vand.u32 %v718, 2147483648
    %v740 = vsel %vm738, %v739, %v737
    %v741 = vrsqrt.pop %v719
    %v742 = vmul.f32 %v719, %v741
    %vm743 = vcmp.eq.f32.partialorder %v719, inf
    %v744 = vsel %vm743, %v719, %v742
    %vm745 = vcmp.eq.f32.partialorder %v719, 0.0
    %v746 = vand.u32 %v719, 2147483648
    %v747 = vsel %vm745, %v746, %v744
    %v748 = vadd.f32 %v726, 1e-06
    %v749 = vadd.f32 %v733, 1e-06
    %v750 = vadd.f32 %v740, 1e-06
    %v751 = vadd.f32 %v747, 1e-06
    %v752 = vrcp.pop %v748
    %v753 = vmul.f32 %v592, %v752
    %v754 = vrcp.pop %v749
    %v755 = vmul.f32 %v599, %v754
    %v756 = vrcp.pop %v750
    %v757 = vmul.f32 %v606, %v756
    %v758 = vrcp.pop %v751
    %v759 = vmul.f32 %v613, %v758
    %v760 = vadd.f32 %v401, %v753
    %v761 = vadd.f32 %v402, %v755
    %v762 = vadd.f32 %v403, %v757
    %v763 = vadd.f32 %v404, %v759
    %v768 = vcombine.low %v760, %v761
    %v769 = vcombine.low %v762, %v763
    %v771 = vunpack.c.l.s4 1966171168
    %v772 = vunpack.c.0.s8 %v771
    %v773 = vlaneseq
    %v774 = vshrl.u32 %v773, 7
    %v775 = vsub.s32 %v772, %v774
    %v776 = vrot.slane %v768, %v775
    %v778 = vunpack.c.l.s4 1966171168
    %v779 = vunpack.c.0.s8 %v778
    %v780 = vlaneseq
    %v781 = vshrl.u32 %v780, 7
    %v782 = vsub.s32 %v779, %v781
    %v783 = vrot.slane %v769, %v782
    %v784 = vcombine.low %v776, %v783
    %v786 = vunpack.c.l.s4 1966171168
    %v787 = vunpack.c.0.s8 %v786
    %v788 = vlaneseq
    %v789 = vshrl.u32 %v788, 7
    %v790 = vsub.s32 %v787, %v789
    %v791 = vrot.slane %v784, %v790
    %v793 = vadd.f32 %v45, %v791
    %v794 = vlaneseq
    %vm795 = vcmp.ge.s32.totalorder %v794, 0
    %vm796 = vcmp.lt.s32.totalorder %v794, 512
    %vm797 = vmand %vm795, %vm796
    %798 = vst.msk [vmem:[#allocation2] sm:$0xf] %vm797, %v793
    // Predicated region
    $region22: #{tpu_custom_call.1} parent=1 // pred_check
      %p799 = pneg %p36
    $region23: #{tpu_custom_call.1} parent=1 // pred_check_branch
      %801 = sbr.rel (%p799) target = $region25
    $region24: #{tpu_custom_call.1} parent=1 // pred_region
      %v802 = vld [vmem:[#allocation2] sm:$0xf]
      %v804 = vlaneseq
      %v805 = vshrl.u32 %v804, 7
      %v806 = vsub.s32 0, %v805
      %v807 = vrot.slane %v802, %v806
      %v808 = vlaneseq
      %v809 = vshrl.u32 %v808, 7
      %v810 = vsub.s32 1, %v809
      %v811 = vrot.slane %v802, %v810
      %v812 = vlaneseq
      %v813 = vshrl.u32 %v812, 7
      %v814 = vsub.s32 2, %v813
      %v815 = vrot.slane %v802, %v814
      %v816 = vlaneseq
      %v817 = vshrl.u32 %v816, 7
      %v818 = vsub.s32 3, %v817
      %v819 = vrot.slane %v802, %v818
      %vm824 = vcmask 1040384
      %v825 = vsel %vm824, %v807, 0.0
      %v826 = vsel %vm824, %v811, 0.0
      %v827 = vadd.f32 %v825, %v826
      %v828 = vsel %vm824, %v815, 0.0
      %v829 = vadd.f32 %v827, %v828
      %v830 = vsel %vm824, %v819, 0.0
      %v831 = vadd.f32 %v829, %v830
      %832 = vadd.xlane.f32.xlu0 %v831
      %v833 = vpop.xlane.xlu0 %832
      %v834 = vrot.slane %v833, 4
      %v835 = vadd.f32 %v833, %v834
      %v836 = vrot.slane %v835, 2
      %v837 = vadd.f32 %v835, %v836
      %v838 = vrot.slane %v837, 1
      %v839 = vadd.f32 %v837, %v838
      %s840 = vtos %v839
      %s841 = scalar_lea.smem [#allocation8], 0
      %842 = sst [smem:[%s841]] %s840
    $region25: #{tpu_custom_call.1} parent=1 // pred_fallthru
      _
    // Predicated region
    $region26: #{tpu_custom_call.1} parent=1 // pred_check
      _
    $region27: #{tpu_custom_call.1} parent=1 // pred_check_branch
      %844 = sbr.rel (0) target = $region29
    $region28: #{tpu_custom_call.1} parent=1 // pred_region
      %s846 = ssub.s32 16, 16
      %847 = vsyncadd [#allocation5], %s846
      %850 = dma.smem_to_hbm [#allocation8], 16, %s2, [#allocation5]
    $region29: #{tpu_custom_call.1} parent=1 // pred_fallthru
      _
    // Predicated region
    $region30: #{tpu_custom_call.1} parent=1 // pred_check
      _
    $region31: #{tpu_custom_call.1} parent=1 // pred_check_branch
      %852 = sbr.rel (0) target = $region33
    $region32: #{tpu_custom_call.1} parent=1 // pred_region
      %853 = dma.done [#allocation5], 16
    $region33: #{tpu_custom_call.1} parent=1 // pred_fallthru
      _
    %854 = sfence
    %855 = vsyncpa [#allocation4], 1
    %856 = vsyncpa [#allocation7], 1
    %857 = vsyncpa [#allocation5], 1

</llo_original>
